<compile_context>
chip_gen: v5e
topology: v5e:2x2
jax: 0.10.0
libtpu: 0.0.40
codegen_flags: <defaults>
</compile_context>

<pallas_src>
import jax
import jax.numpy as jnp
from jax import lax
from jax.experimental import pallas as pl
from jax.experimental.pallas import tpu as pltpu

EPS = 1e-7


def mlp_head_kernel(x_ref, w1_ref, b1_ref, w2_ref, b2_ref, w3_ref, b3_ref, o_ref):
    # x_ref: (TILE_B, D_in) f32 -> cast to bf16 here (saves a wrapper HBM pass).
    x = x_ref[...].astype(jnp.bfloat16)

    # Linear 1 + ReLU (MXU bf16 inputs, f32 accumulation; elementwise math in f32)
    h = jnp.dot(x, w1_ref[...], preferred_element_type=jnp.float32) + b1_ref[...]
    h = jnp.maximum(h, 0.0)

    # Linear 2 + ReLU
    h = jnp.dot(h.astype(jnp.bfloat16), w2_ref[...],
                preferred_element_type=jnp.float32) + b2_ref[...]
    h = jnp.maximum(h, 0.0)

    # Linear 3 (output projection, N = out_size; MXU underfilled but work is tiny)
    y = jnp.dot(h.astype(jnp.bfloat16), w3_ref[...],
                preferred_element_type=jnp.float32) + b3_ref[...]

    # F.normalize(p=2, dim=1, eps=1e-7):
    #   y / max(||y||, eps) == y * rsqrt(max(||y||^2, eps^2))   (EUP rsqrt, free slot)
    sq = jnp.sum(y * y, axis=1, keepdims=True)
    inv = lax.rsqrt(jnp.maximum(sq, EPS * EPS))
    o_ref[...] = y * inv


def _choose_tile_b(B, d_in, out_size, weight_bytes, tile_b):
    """Pick a batch tile: as large as fits a ~40 MiB VMEM budget (safe on v7x's
    64 MiB/TC), and with >=2 grid steps for mid/large batches so the 'parallel'
    grid axis can shard across both v7x TensorCores."""
    def vmem_bytes(t):
        # x / out tiles are double-buffered by the BlockSpec pipeline.
        return 2 * t * (d_in + out_size) * 4 + weight_bytes

    budget = 40 * 1024 * 1024
    while tile_b > 64 and vmem_bytes(tile_b) > budget:
        tile_b //= 2

    if B <= tile_b:
        if B >= 256:
            # Split into 2 tiles (multiple of 8 sublanes for f32) -> both v7x TCs
            # get work; negligible extra step cost on single-TC v5e/v6e.
            tile_b = (((B + 1) // 2) + 7) // 8 * 8
        else:
            tile_b = B          # single full-extent tile (legal for any B)
    return tile_b, vmem_bytes(tile_b)


def mlp_head_forward(x, params, *, tile_b=1024):
    """x: (B, input_size) float32.
    params: output of prepare_params() — w1/w2/w3 bf16 (in, out), b1/b2/b3 f32 (1, out).
    """
    w1, b1, w2, b2, w3, b3 = (params[k] for k in ("w1", "b1", "w2", "b2", "w3", "b3"))
    B, d_in = x.shape
    hidden = w1.shape[1]
    out_size = w3.shape[1]

    # Resident weights are (conservatively) counted double-buffered.
    # TODO(synk): single-buffer the constant-index weight blocks (pipeline_mode=
    # pl.Buffered(1)) once verified on the target jax version; frees VMEM for
    # bigger batch tiles at large d_in.
    weight_bytes = 2 * ((w1.size + w2.size + w3.size) * 2
                        + (b1.size + b2.size + b3.size) * 4)
    tile_b, vmem_needed = _choose_tile_b(B, d_in, out_size, weight_bytes, tile_b)
    num_tiles = pl.cdiv(B, tile_b)   # boundary block (if any) is masked by Pallas;
                                     # garbage tail rows are row-independent and
                                     # their OOB stores are dropped.

    cost = pl.CostEstimate(
        flops=2 * B * (d_in * hidden + hidden * hidden + hidden * out_size),
        transcendentals=B,          # one rsqrt per row
        bytes_accessed=(x.size * 4                                   # x (f32, streamed)
                        + (w1.size + w2.size + w3.size) * 2          # bf16 weights
                        + (b1.size + b2.size + b3.size) * 4          # f32 biases
                        + B * out_size * 4),                         # unpadded f32 out
    )

    vmem_limit = int(min(max(1.2 * vmem_needed + 2 * 2**20, 16 * 2**20), 48 * 2**20))

    return pl.pallas_call(
        mlp_head_kernel,
        out_shape=jax.ShapeDtypeStruct((B, out_size), jnp.float32),
        grid_spec=pltpu.PrefetchScalarGridSpec(
            num_scalar_prefetch=0,
            grid=(num_tiles,),
            in_specs=[
                pl.BlockSpec((tile_b, d_in), lambda i: (i, 0)),     # x: streamed f32
                pl.BlockSpec((d_in, hidden), lambda i: (0, 0)),     # w1: VMEM-resident
                pl.BlockSpec((1, hidden), lambda i: (0, 0)),        # b1: resident
                pl.BlockSpec((hidden, hidden), lambda i: (0, 0)),   # w2: resident
                pl.BlockSpec((1, hidden), lambda i: (0, 0)),        # b2: resident
                pl.BlockSpec((hidden, out_size), lambda i: (0, 0)), # w3: resident, unpadded
                pl.BlockSpec((1, out_size), lambda i: (0, 0)),      # b3: resident
            ],
            out_specs=pl.BlockSpec((tile_b, out_size), lambda i: (i, 0)),
        ),
        compiler_params=pltpu.CompilerParams(
            dimension_semantics=("parallel",),   # shard batch tiles across TCs (v7x)
            vmem_limit_bytes=vmem_limit,
        ),
        cost_estimate=cost,
    )(x, w1, b1, w2, b2, w3, b3)


def prepare_params(params):
    """One-time preprocessing hoisted off the per-call path:
    weights -> bf16 (MXU native), biases -> (1, N) f32."""
    def row(b):
        return jnp.asarray(b, jnp.float32).reshape(1, -1)
    return {
        "w1": jnp.asarray(params["w1"], jnp.bfloat16),
        "b1": row(params["b1"]),
        "w2": jnp.asarray(params["w2"], jnp.bfloat16),
        "b2": row(params["b2"]),
        "w3": jnp.asarray(params["w3"], jnp.bfloat16),
        "b3": row(params["b3"]),
    }


def init_params(key, input_size, output_size, hidden_size=256):
    """Mirrors trunc_normal_(std=0.02, a=-2, b=2) weights (effectively an untruncated
    N(0, 0.02) since |a|/std = 100 sigma) and zero biases."""
    std = 0.02
    k1, k2, k3 = jax.random.split(key, 3)

    def trunc(k, shape):
        w = jax.random.normal(k, shape, jnp.float32) * std
        return jnp.clip(w, -2.0, 2.0)   # matches absolute clamp at +/-2 (a no-op here)

    return {
        "w1": trunc(k1, (input_size, hidden_size)),
        "b1": jnp.zeros((1, hidden_size), jnp.float32),
        "w2": trunc(k2, (hidden_size, hidden_size)),
        "b2": jnp.zeros((1, hidden_size), jnp.float32),
        "w3": trunc(k3, (hidden_size, output_size)),
        "b3": jnp.zeros((1, output_size), jnp.float32),
    }


def reference_forward_f32(x, params):
    """Full-precision reference for the original module semantics."""
    h = jnp.maximum(x @ params["w1"] + params["b1"], 0.0)
    h = jnp.maximum(h @ params["w2"] + params["b2"], 0.0)
    y = h @ params["w3"] + params["b3"]
    norm = jnp.maximum(jnp.linalg.norm(y, axis=1, keepdims=True), EPS)
    return y / norm


def reference_forward_bf16(x, params):
    """Reference mirroring the kernel's bf16-matmul / f32-accumulate numerics."""
    bf = jnp.bfloat16
    h = jnp.dot(x.astype(bf), params["w1"].astype(bf),
                preferred_element_type=jnp.float32) + params["b1"]
    h = jnp.maximum(h, 0.0)
    h = jnp.dot(h.astype(bf), params["w2"].astype(bf),
                preferred_element_type=jnp.float32) + params["b2"]
    h = jnp.maximum(h, 0.0)
    y = jnp.dot(h.astype(bf), params["w3"].astype(bf),
                preferred_element_type=jnp.float32) + params["b3"]
    sq = jnp.sum(y * y, axis=1, keepdims=True)
    return y * lax.rsqrt(jnp.maximum(sq, EPS * EPS))


if __name__ == "__main__":
    key = jax.random.PRNGKey(0)
    k_x, k_p = jax.random.split(key)

    B, input_size, hidden_size, output_size = 8, 32, 256, 16
    x = jax.random.normal(k_x, (B, input_size), jnp.float32)
    params = init_params(k_p, input_size, output_size, hidden_size)

    prepared = prepare_params(params)        # one-time bf16 weight cast (off hot path)
    fwd = jax.jit(mlp_head_forward)          # remaining wrapper ops fuse under jit

    out = jax.block_until_ready(fwd(x, prepared))
    assert out.shape == (B, output_size)

    # Tight check vs. a reference using the same bf16-matmul / f32-accumulate numerics.
    ref_bf16 = reference_forward_bf16(x, params)
    assert jnp.allclose(out, ref_bf16, atol=5e-3, rtol=5e-3), "mismatch vs bf16 reference"

    # Looser check vs. the full-f32 module semantics (bf16 inputs widen tolerance).
    ref_f32 = reference_forward_f32(x, params)
    assert jnp.allclose(out, ref_f32, atol=5e-2, rtol=5e-2), "mismatch vs f32 reference"

    # Unit-norm rows (F.normalize semantics).
    assert jnp.allclose(jnp.linalg.norm(out, axis=1), 1.0, atol=1e-3)

    print("KERNEL_OK")
</pallas_src>

<mosaic_0001>
module attributes {stable_mosaic.version = 11 : i64} {
  func.func @mlp_head_kernel(%arg0: i32, %arg1: memref<8x32xf32, #tpu.memory_space<vmem>>, %arg2: memref<32x256xbf16, #tpu.memory_space<vmem>>, %arg3: memref<1x256xf32, #tpu.memory_space<vmem>>, %arg4: memref<256x256xbf16, #tpu.memory_space<vmem>>, %arg5: memref<1x256xf32, #tpu.memory_space<vmem>>, %arg6: memref<256x16xbf16, #tpu.memory_space<vmem>>, %arg7: memref<1x16xf32, #tpu.memory_space<vmem>>, %arg8: memref<8x16xf32, #tpu.memory_space<vmem>>) attributes {dimension_semantics = [#tpu.dimension_semantics<parallel>], iteration_bounds = array<i64: 1>, scalar_prefetch = 0 : i64, scratch_operands = 0 : i64, tpu.core_type = #tpu.core_type<tc>, window_params = [{transform_indices = @transform_0, window_bounds = array<i64: 8, 32>}, {pipeline_mode = #tpu.pipeline_mode<synchronous>, transform_indices = @transform_1, window_bounds = array<i64: 32, 256>}, {pipeline_mode = #tpu.pipeline_mode<synchronous>, transform_indices = @transform_2, window_bounds = array<i64: 1, 256>}, {pipeline_mode = #tpu.pipeline_mode<synchronous>, transform_indices = @transform_3, window_bounds = array<i64: 256, 256>}, {pipeline_mode = #tpu.pipeline_mode<synchronous>, transform_indices = @transform_4, window_bounds = array<i64: 1, 256>}, {pipeline_mode = #tpu.pipeline_mode<synchronous>, transform_indices = @transform_5, window_bounds = array<i64: 256, 16>}, {pipeline_mode = #tpu.pipeline_mode<synchronous>, transform_indices = @transform_6, window_bounds = array<i64: 1, 16>}, {transform_indices = @transform_7, window_bounds = array<i64: 8, 16>}]} {
    %c0 = arith.constant 0 : index
    %c0_0 = arith.constant 0 : index
    %0 = vector.load %arg1[%c0, %c0_0] : memref<8x32xf32, #tpu.memory_space<vmem>>, vector<8x32xf32>
    %1 = arith.truncf %0 : vector<8x32xf32> to vector<8x32xbf16>
    %c0_1 = arith.constant 0 : index
    %c0_2 = arith.constant 0 : index
    %2 = vector.load %arg2[%c0_1, %c0_2] : memref<32x256xbf16, #tpu.memory_space<vmem>>, vector<32x256xbf16>
    %cst = arith.constant dense<0.000000e+00> : vector<8x256xf32>
    %3 = tpu.matmul %1, %2, %cst {dimension_numbers = #tpu.dot_dimension_numbers<[1], [0], [0], [1], [0, 0, 1, 1], [], []>} : vector<8x32xbf16>, vector<32x256xbf16>, vector<8x256xf32> -> vector<8x256xf32>
    %c0_3 = arith.constant 0 : index
    %c0_4 = arith.constant 0 : index
    %4 = vector.load %arg3[%c0_3, %c0_4] : memref<1x256xf32, #tpu.memory_space<vmem>>, vector<1x256xf32>
    %5 = vector.broadcast %4 : vector<1x256xf32> to vector<8x256xf32>
    %6 = arith.addf %3, %5 : vector<8x256xf32>
    %cst_5 = arith.constant 0.000000e+00 : f32
    %7 = vector.broadcast %cst_5 : f32 to vector<8x256xf32>
    %8 = arith.maximumf %6, %7 : vector<8x256xf32>
    %9 = arith.truncf %8 : vector<8x256xf32> to vector<8x256xbf16>
    %c0_6 = arith.constant 0 : index
    %c0_7 = arith.constant 0 : index
    %10 = vector.load %arg4[%c0_6, %c0_7] : memref<256x256xbf16, #tpu.memory_space<vmem>>, vector<256x256xbf16>
    %cst_8 = arith.constant dense<0.000000e+00> : vector<8x256xf32>
    %11 = tpu.matmul %9, %10, %cst_8 {dimension_numbers = #tpu.dot_dimension_numbers<[1], [0], [0], [1], [0, 0, 1, 1], [], []>} : vector<8x256xbf16>, vector<256x256xbf16>, vector<8x256xf32> -> vector<8x256xf32>
    %c0_9 = arith.constant 0 : index
    %c0_10 = arith.constant 0 : index
    %12 = vector.load %arg5[%c0_9, %c0_10] : memref<1x256xf32, #tpu.memory_space<vmem>>, vector<1x256xf32>
    %13 = vector.broadcast %12 : vector<1x256xf32> to vector<8x256xf32>
    %14 = arith.addf %11, %13 : vector<8x256xf32>
    %cst_11 = arith.constant 0.000000e+00 : f32
    %15 = vector.broadcast %cst_11 : f32 to vector<8x256xf32>
    %16 = arith.maximumf %14, %15 : vector<8x256xf32>
    %17 = arith.truncf %16 : vector<8x256xf32> to vector<8x256xbf16>
    %c0_12 = arith.constant 0 : index
    %c0_13 = arith.constant 0 : index
    %18 = vector.load %arg6[%c0_12, %c0_13] : memref<256x16xbf16, #tpu.memory_space<vmem>>, vector<256x16xbf16>
    %cst_14 = arith.constant dense<0.000000e+00> : vector<8x16xf32>
    %19 = tpu.matmul %17, %18, %cst_14 {dimension_numbers = #tpu.dot_dimension_numbers<[1], [0], [0], [1], [0, 0, 1, 1], [], []>} : vector<8x256xbf16>, vector<256x16xbf16>, vector<8x16xf32> -> vector<8x16xf32>
    %c0_15 = arith.constant 0 : index
    %c0_16 = arith.constant 0 : index
    %20 = vector.load %arg7[%c0_15, %c0_16] : memref<1x16xf32, #tpu.memory_space<vmem>>, vector<1x16xf32>
    %21 = vector.broadcast %20 : vector<1x16xf32> to vector<8x16xf32>
    %22 = arith.addf %19, %21 : vector<8x16xf32>
    %23 = arith.mulf %22, %22 : vector<8x16xf32>
    %cst_17 = arith.constant dense<0.000000e+00> : vector<8xf32>
    %24 = vector.multi_reduction <add>, %23, %cst_17 [1] : vector<8x16xf32> to vector<8xf32>
    %25 = vector.shape_cast %24 : vector<8xf32> to vector<8x1xf32>
    %cst_18 = arith.constant 9.99999982E-15 : f32
    %26 = vector.broadcast %cst_18 : f32 to vector<8x1xf32>
    %27 = arith.maximumf %25, %26 : vector<8x1xf32>
    %28 = math.rsqrt %27 : vector<8x1xf32>
    %29 = vector.broadcast %28 : vector<8x1xf32> to vector<8x16xf32>
    %30 = arith.mulf %22, %29 : vector<8x16xf32>
    %c0_19 = arith.constant 0 : index
    %c0_20 = arith.constant 0 : index
    %31 = vector.load %arg8[%c0_19, %c0_20] : memref<8x16xf32, #tpu.memory_space<vmem>>, vector<8x16xf32>
    tpu.vector_store %arg8[%c0_19, %c0_20], %30 {strides = array<i32>} : memref<8x16xf32, #tpu.memory_space<vmem>>, vector<8x16xf32>,
    return
  }
  func.func @transform_0(%arg0: i32) -> (i32, i32) {
    %c0_i32 = arith.constant 0 : i32
    %c0_i32_0 = arith.constant 0 : i32
    return %arg0, %c0_i32 : i32, i32
  }
  func.func @transform_1(%arg0: i32) -> (i32, i32) {
    %c0_i32 = arith.constant 0 : i32
    %c0_i32_0 = arith.constant 0 : i32
    %c0_i32_1 = arith.constant 0 : i32
    return %c0_i32, %c0_i32_0 : i32, i32
  }
  func.func @transform_2(%arg0: i32) -> (i32, i32) {
    %c0_i32 = arith.constant 0 : i32
    %c0_i32_0 = arith.constant 0 : i32
    %c0_i32_1 = arith.constant 0 : i32
    return %c0_i32, %c0_i32_0 : i32, i32
  }
  func.func @transform_3(%arg0: i32) -> (i32, i32) {
    %c0_i32 = arith.constant 0 : i32
    %c0_i32_0 = arith.constant 0 : i32
    %c0_i32_1 = arith.constant 0 : i32
    return %c0_i32, %c0_i32_0 : i32, i32
  }
  func.func @transform_4(%arg0: i32) -> (i32, i32) {
    %c0_i32 = arith.constant 0 : i32
    %c0_i32_0 = arith.constant 0 : i32
    %c0_i32_1 = arith.constant 0 : i32
    return %c0_i32, %c0_i32_0 : i32, i32
  }
  func.func @transform_5(%arg0: i32) -> (i32, i32) {
    %c0_i32 = arith.constant 0 : i32
    %c0_i32_0 = arith.constant 0 : i32
    %c0_i32_1 = arith.constant 0 : i32
    return %c0_i32, %c0_i32_0 : i32, i32
  }
  func.func @transform_6(%arg0: i32) -> (i32, i32) {
    %c0_i32 = arith.constant 0 : i32
    %c0_i32_0 = arith.constant 0 : i32
    %c0_i32_1 = arith.constant 0 : i32
    return %c0_i32, %c0_i32_0 : i32, i32
  }
  func.func @transform_7(%arg0: i32) -> (i32, i32) {
    %c0_i32 = arith.constant 0 : i32
    %c0_i32_0 = arith.constant 0 : i32
    return %arg0, %c0_i32 : i32, i32
  }
}

</mosaic_0001>

<llo_original>
// kernel: mlp_head_forward.1
$region0: #{mlp_head_forward.1}
  #allocation0 [shape = 'u32[]', space=smem, size = 0x4, offset = 0x4, fixed_abs, tag = 'smem constant byte address 0x4 - core index']
  #allocation1 [shape = 'u32[72,128]{1,0:T(1,128)}', space=vmem, size = 0x9000, scoped, tag = 'internal scratch']
  %s0 = inlined_call_operand.vmem [shape: f32[8,32], index: 0, kind: input, shape index: {}]
  %s1 = inlined_call_operand.vmem [shape: bf16[32,256], index: 1, kind: input, shape index: {}]
  %s2 = inlined_call_operand.vmem [shape: f32[1,256], index: 2, kind: input, shape index: {}]
  %s3 = inlined_call_operand.hbm [shape: bf16[256,256], index: 3, kind: input, shape index: {}]
  %s4 = inlined_call_operand.vmem [shape: f32[1,256], index: 4, kind: input, shape index: {}]
  %s5 = inlined_call_operand.vmem [shape: bf16[256,16], index: 5, kind: input, shape index: {}]
  %s6 = inlined_call_operand.vmem [shape: f32[1,16], index: 6, kind: input, shape index: {}]
  %s7 = inlined_call_operand.hbm [shape: f32[8,16], index: 7, kind: output, shape index: {}]
  %s8 = sld [smem:[#allocation0]]
  $region42: #{mlp_head_forward.1} parent=0
    _
  %s10 = ssub.s32 1, %s8
  %s11 = scalar_select 0, %s10, %s8
  $region1: #{mlp_head_forward.1} parent=0
    #allocation2 [shape = 'u8[131072]{0}', space=vmem, size = 0x20000, scoped, tag = 'input window, operand 3, single buffered']
    #allocation3 [shape = 's32[1]{0}', space=sflag, size = 0x4, scoped, tag = 'scoped memory for mlp_head_forward.1']
    #allocation4 [shape = 's32[1]{0}', space=sflag, size = 0x4, scoped, tag = 'scoped memory for mlp_head_forward.1']
    #allocation5 [shape = 'u8[4096]{0}', space=vmem, size = 0x1000, scoped, tag = 'output window, operand 0, single buffered']
    %12 = vsyncpa [#allocation3], 0
    %13 = vsyncpa [#allocation4], 0
    // Predicated region
    $region2: #{mlp_head_forward.1} parent=1 // pred_check
      _
    $region3: #{mlp_head_forward.1} parent=1 // pred_check_branch
      %15 = sbr.rel (0) target = $region5
    $region4: #{mlp_head_forward.1} parent=1 // pred_region
      _
    $region5: #{mlp_head_forward.1} parent=1 // pred_fallthru
      _
    // Predicated region
    $region6: #{mlp_head_forward.1} parent=1 // pred_check
      _
    $region7: #{mlp_head_forward.1} parent=1 // pred_check_branch
      %17 = sbr.rel (0) target = $region9
    $region8: #{mlp_head_forward.1} parent=1 // pred_region
      _
    $region9: #{mlp_head_forward.1} parent=1 // pred_fallthru
      _
    // Predicated region
    $region10: #{mlp_head_forward.1} parent=1 // pred_check
      _
    $region11: #{mlp_head_forward.1} parent=1 // pred_check_branch
      %19 = sbr.rel (0) target = $region13
    $region12: #{mlp_head_forward.1} parent=1 // pred_region
      _
    $region13: #{mlp_head_forward.1} parent=1 // pred_fallthru
      _
    // Predicated region
    $region14: #{mlp_head_forward.1} parent=1 // pred_check
      _
    $region15: #{mlp_head_forward.1} parent=1 // pred_check_branch
      %21 = sbr.rel (0) target = $region17
    $region16: #{mlp_head_forward.1} parent=1 // pred_region
      %23 = vsyncadd [#allocation3], 0
      %s24 = sshll.u32 %s3, 4
      %s25 = int_to_ptr.hbm [resolvable:$true] %s24
      %s26 = sshll.u32 [#allocation2], 4
      %s27 = int_to_ptr.vmem [resolvable:$true] %s26
      %32 = dma.hbm_to_vmem [thread:$0]  %s25, 4096, %s27, [#allocation3], 128, 128, 8
    $region17: #{mlp_head_forward.1} parent=1 // pred_fallthru
      _
    // Predicated region
    $region18: #{mlp_head_forward.1} parent=1 // pred_check
      _
    $region19: #{mlp_head_forward.1} parent=1 // pred_check_branch
      %34 = sbr.rel (0) target = $region21
    $region20: #{mlp_head_forward.1} parent=1 // pred_region
      _
    $region21: #{mlp_head_forward.1} parent=1 // pred_fallthru
      _
    // Predicated region
    $region22: #{mlp_head_forward.1} parent=1 // pred_check
      _
    $region23: #{mlp_head_forward.1} parent=1 // pred_check_branch
      %36 = sbr.rel (0) target = $region25
    $region24: #{mlp_head_forward.1} parent=1 // pred_region
      _
    $region25: #{mlp_head_forward.1} parent=1 // pred_fallthru
      _
    // Predicated region
    $region26: #{mlp_head_forward.1} parent=1 // pred_check
      _
    $region27: #{mlp_head_forward.1} parent=1 // pred_check_branch
      %38 = sbr.rel (0) target = $region29
    $region28: #{mlp_head_forward.1} parent=1 // pred_region
      _
    $region29: #{mlp_head_forward.1} parent=1 // pred_fallthru
      _
    // Predicated region
    $region30: #{mlp_head_forward.1} parent=1 // pred_check
      _
    $region31: #{mlp_head_forward.1} parent=1 // pred_check_branch
      %40 = sbr.rel (0) target = $region33
    $region32: #{mlp_head_forward.1} parent=1 // pred_region
      %42 = dma.done [#allocation3], 4096
    $region33: #{mlp_head_forward.1} parent=1 // pred_fallthru
      _
    %v44 = vld [vmem:[%s0] sm:$0xff]
    %v45 = vpack.c.bf16 %v44, %v44
    %v46 = vld [vmem:[%s1] sm:$0xff]
    %v47 = vld [vmem:[%s1 + $0x8] sm:$0xff]
    %v48 = vld [vmem:[%s1 + $0x10] sm:$0xff]
    %v49 = vld [vmem:[%s1 + $0x18] sm:$0xff]
    %v50 = vld [vmem:[%s2] sm:$0x3]
    %v52 = vperm.slane %v50, 0
    %v53 = vperm.slane %v50, 1
    %v60 = vunpack.c.l.b16 %v46
    %v61 = vunpack.c.h.b16 %v46
    %v62 = vunpack.c.l.b16 %v47
    %v63 = vunpack.c.h.b16 %v47
    %v64 = vunpack.c.l.b16 %v48
    %v65 = vunpack.c.h.b16 %v48
    %v66 = vunpack.c.l.b16 %v49
    %v67 = vunpack.c.h.b16 %v49
    %v68 = vpack.c.b16 %v62, %v60
    %v69 = vpack.c.b16 %v63, %v61
    %v70 = vpack.c.b16 %v66, %v64
    %v71 = vpack.c.b16 %v67, %v65
    %vm76 = vcmask 261120
    %v78 = vsel %vm76, %v45, 0
    %80 = vmatpush.bf16.msra.mxu0 0
    %81 = vmatpush.bf16.msra.mxu0 0
    %82 = vmatpush.bf16.msra.mxu0 0
    %83 = vmatpush.bf16.msra.mxu0 0
    %84 = vmatpush.bf16.msra.mxu0 0
    %85 = vmatpush.bf16.msra.mxu0 0
    %86 = vmatpush.bf16.msra.mxu0 %v70
    %87 = vmatpush.bf16.msra.mxu0 %v68
    %88 = vmatmul.bf16.gmra.mxu0 %v78
    %v89 = vpop.f32.mrf.mxu0
    %v90 = vadd.f32 %v52, %v89
    %v91 = vpop.f32.mrf.mxu0
    %92 = vdwg.mxu0
    %93 = vmatpush.bf16.msra.mxu0 0
    %94 = vmatpush.bf16.msra.mxu0 0
    %95 = vmatpush.bf16.msra.mxu0 0
    %96 = vmatpush.bf16.msra.mxu0 0
    %97 = vmatpush.bf16.msra.mxu0 0
    %98 = vmatpush.bf16.msra.mxu0 0
    %99 = vmatpush.bf16.msra.mxu0 %v71
    %100 = vmatpush.bf16.msra.mxu0 %v69
    %101 = vmatmul.bf16.gmra.mxu0 %v78
    %v102 = vpop.f32.mrf.mxu0
    %v103 = vadd.f32 %v53, %v102
    %v104 = vpop.f32.mrf.mxu0
    %105 = vdwg.mxu0
    %v106 = vmax.f32 %v90, 0.0
    %v107 = vmax.f32 %v103, 0.0
    %v108 = vpack.c.bf16 %v106, %v106
    %v109 = vpack.c.bf16 %v107, %v107
    %v110 = vld [vmem:[#allocation2] sm:$0xff]
    %v111 = vld [vmem:[#allocation2 + $0x8] sm:$0xff]
    %v112 = vld [vmem:[#allocation2 + $0x10] sm:$0xff]
    %v113 = vld [vmem:[#allocation2 + $0x18] sm:$0xff]
    %v114 = vld [vmem:[#allocation2 + $0x20] sm:$0xff]
    %v115 = vld [vmem:[#allocation2 + $0x28] sm:$0xff]
    %v116 = vld [vmem:[#allocation2 + $0x30] sm:$0xff]
    %v117 = vld [vmem:[#allocation2 + $0x38] sm:$0xff]
    %v118 = vld [vmem:[#allocation2 + $0x40] sm:$0xff]
    %v119 = vld [vmem:[#allocation2 + $0x48] sm:$0xff]
    %v120 = vld [vmem:[#allocation2 + $0x50] sm:$0xff]
    %v121 = vld [vmem:[#allocation2 + $0x58] sm:$0xff]
    %v122 = vld [vmem:[#allocation2 + $0x60] sm:$0xff]
    %v123 = vld [vmem:[#allocation2 + $0x68] sm:$0xff]
    %v124 = vld [vmem:[#allocation2 + $0x70] sm:$0xff]
    %v125 = vld [vmem:[#allocation2 + $0x78] sm:$0xff]
    %v126 = vld [vmem:[#allocation2 + $0x80] sm:$0xff]
    %v127 = vld [vmem:[#allocation2 + $0x88] sm:$0xff]
    %v128 = vld [vmem:[#allocation2 + $0x90] sm:$0xff]
    %v129 = vld [vmem:[#allocation2 + $0x98] sm:$0xff]
    %v130 = vld [vmem:[#allocation2 + $0xa0] sm:$0xff]
    %v131 = vld [vmem:[#allocation2 + $0xa8] sm:$0xff]
    %v132 = vld [vmem:[#allocation2 + $0xb0] sm:$0xff]
    %v133 = vld [vmem:[#allocation2 + $0xb8] sm:$0xff]
    %v134 = vld [vmem:[#allocation2 + $0xc0] sm:$0xff]
    %v135 = vld [vmem:[#allocation2 + $0xc8] sm:$0xff]
    %v136 = vld [vmem:[#allocation2 + $0xd0] sm:$0xff]
    %v137 = vld [vmem:[#allocation2 + $0xd8] sm:$0xff]
    %v138 = vld [vmem:[#allocation2 + $0xe0] sm:$0xff]
    %v139 = vld [vmem:[#allocation2 + $0xe8] sm:$0xff]
    %v140 = vld [vmem:[#allocation2 + $0xf0] sm:$0xff]
    %v141 = vld [vmem:[#allocation2 + $0xf8] sm:$0xff]
    %v142 = vld [vmem:[%s4] sm:$0x3]
    %v144 = vperm.slane %v142, 0
    %v145 = vperm.slane %v142, 1
    %v180 = vunpack.c.l.b16 %v110
    %v181 = vunpack.c.h.b16 %v110
    %v182 = vunpack.c.l.b16 %v111
    %v183 = vunpack.c.h.b16 %v111
    %v184 = vunpack.c.l.b16 %v112
    %v185 = vunpack.c.h.b16 %v112
    %v186 = vunpack.c.l.b16 %v113
    %v187 = vunpack.c.h.b16 %v113
    %v188 = vunpack.c.l.b16 %v114
    %v189 = vunpack.c.h.b16 %v114
    %v190 = vunpack.c.l.b16 %v115
    %v191 = vunpack.c.h.b16 %v115
    %v192 = vunpack.c.l.b16 %v116
    %v193 = vunpack.c.h.b16 %v116
    %v194 = vunpack.c.l.b16 %v117
    %v195 = vunpack.c.h.b16 %v117
    %v196 = vunpack.c.l.b16 %v118
    %v197 = vunpack.c.h.b16 %v118
    %v198 = vunpack.c.l.b16 %v119
    %v199 = vunpack.c.h.b16 %v119
    %v200 = vunpack.c.l.b16 %v120
    %v201 = vunpack.c.h.b16 %v120
    %v202 = vunpack.c.l.b16 %v121
    %v203 = vunpack.c.h.b16 %v121
    %v204 = vunpack.c.l.b16 %v122
    %v205 = vunpack.c.h.b16 %v122
    %v206 = vunpack.c.l.b16 %v123
    %v207 = vunpack.c.h.b16 %v123
    %v208 = vunpack.c.l.b16 %v124
    %v209 = vunpack.c.h.b16 %v124
    %v210 = vunpack.c.l.b16 %v125
    %v211 = vunpack.c.h.b16 %v125
    %v212 = vunpack.c.l.b16 %v126
    %v213 = vunpack.c.h.b16 %v126
    %v214 = vunpack.c.l.b16 %v127
    %v215 = vunpack.c.h.b16 %v127
    %v216 = vunpack.c.l.b16 %v128
    %v217 = vunpack.c.h.b16 %v128
    %v218 = vunpack.c.l.b16 %v129
    %v219 = vunpack.c.h.b16 %v129
    %v220 = vunpack.c.l.b16 %v130
    %v221 = vunpack.c.h.b16 %v130
    %v222 = vunpack.c.l.b16 %v131
    %v223 = vunpack.c.h.b16 %v131
    %v224 = vunpack.c.l.b16 %v132
    %v225 = vunpack.c.h.b16 %v132
    %v226 = vunpack.c.l.b16 %v133
    %v227 = vunpack.c.h.b16 %v133
    %v228 = vunpack.c.l.b16 %v134
    %v229 = vunpack.c.h.b16 %v134
    %v230 = vunpack.c.l.b16 %v135
    %v231 = vunpack.c.h.b16 %v135
    %v232 = vunpack.c.l.b16 %v136
    %v233 = vunpack.c.h.b16 %v136
    %v234 = vunpack.c.l.b16 %v137
    %v235 = vunpack.c.h.b16 %v137
    %v236 = vunpack.c.l.b16 %v138
    %v237 = vunpack.c.h.b16 %v138
    %v238 = vunpack.c.l.b16 %v139
    %v239 = vunpack.c.h.b16 %v139
    %v240 = vunpack.c.l.b16 %v140
    %v241 = vunpack.c.h.b16 %v140
    %v242 = vunpack.c.l.b16 %v141
    %v243 = vunpack.c.h.b16 %v141
    %v244 = vpack.c.b16 %v182, %v180
    %v245 = vpack.c.b16 %v183, %v181
    %v246 = vpack.c.b16 %v186, %v184
    %v247 = vpack.c.b16 %v187, %v185
    %v248 = vpack.c.b16 %v190, %v188
    %v249 = vpack.c.b16 %v191, %v189
    %v250 = vpack.c.b16 %v194, %v192
    %v251 = vpack.c.b16 %v195, %v193
    %v252 = vpack.c.b16 %v198, %v196
    %v253 = vpack.c.b16 %v199, %v197
    %v254 = vpack.c.b16 %v202, %v200
    %v255 = vpack.c.b16 %v203, %v201
    %v256 = vpack.c.b16 %v206, %v204
    %v257 = vpack.c.b16 %v207, %v205
    %v258 = vpack.c.b16 %v210, %v208
    %v259 = vpack.c.b16 %v211, %v209
    %v260 = vpack.c.b16 %v214, %v212
    %v261 = vpack.c.b16 %v215, %v213
    %v262 = vpack.c.b16 %v218, %v216
    %v263 = vpack.c.b16 %v219, %v217
    %v264 = vpack.c.b16 %v222, %v220
    %v265 = vpack.c.b16 %v223, %v221
    %v266 = vpack.c.b16 %v226, %v224
    %v267 = vpack.c.b16 %v227, %v225
    %v268 = vpack.c.b16 %v230, %v228
    %v269 = vpack.c.b16 %v231, %v229
    %v270 = vpack.c.b16 %v234, %v232
    %v271 = vpack.c.b16 %v235, %v233
    %v272 = vpack.c.b16 %v238, %v236
    %v273 = vpack.c.b16 %v239, %v237
    %v274 = vpack.c.b16 %v242, %v240
    %v275 = vpack.c.b16 %v243, %v241
    %308 = vmatpush.bf16.msra.mxu0 %v258
    %309 = vmatpush.bf16.msra.mxu0 %v256
    %310 = vmatpush.bf16.msra.mxu0 %v254
    %311 = vmatpush.bf16.msra.mxu0 %v252
    %312 = vmatpush.bf16.msra.mxu0 %v250
    %313 = vmatpush.bf16.msra.mxu0 %v248
    %314 = vmatpush.bf16.msra.mxu0 %v246
    %315 = vmatpush.bf16.msra.mxu0 %v244
    %316 = vmatmul.bf16.gmra.mxu0 %v108
    %v317 = vpop.f32.mrf.mxu0
    %v318 = vadd.f32 %v144, %v317
    %v319 = vpop.f32.mrf.mxu0
    %320 = vdwg.mxu0
    %321 = vmatpush.bf16.msra.mxu0 %v274
    %322 = vmatpush.bf16.msra.mxu0 %v272
    %323 = vmatpush.bf16.msra.mxu0 %v270
    %324 = vmatpush.bf16.msra.mxu0 %v268
    %325 = vmatpush.bf16.msra.mxu0 %v266
    %326 = vmatpush.bf16.msra.mxu0 %v264
    %327 = vmatpush.bf16.msra.mxu0 %v262
    %328 = vmatpush.bf16.msra.mxu0 %v260
    %329 = vmatmul.bf16.gmra.mxu0 %v109
    %v330 = vpop.f32.mrf.mxu0
    %v331 = vadd.f32 %v318, %v330
    %v332 = vpop.f32.mrf.mxu0
    %333 = vdwg.mxu0
    %334 = vmatpush.bf16.msra.mxu0 %v259
    %335 = vmatpush.bf16.msra.mxu0 %v257
    %336 = vmatpush.bf16.msra.mxu0 %v255
    %337 = vmatpush.bf16.msra.mxu0 %v253
    %338 = vmatpush.bf16.msra.mxu0 %v251
    %339 = vmatpush.bf16.msra.mxu0 %v249
    %340 = vmatpush.bf16.msra.mxu0 %v247
    %341 = vmatpush.bf16.msra.mxu0 %v245
    %342 = vmatmul.bf16.gmra.mxu0 %v108
    %v343 = vpop.f32.mrf.mxu0
    %v344 = vadd.f32 %v145, %v343
    %v345 = vpop.f32.mrf.mxu0
    %346 = vdwg.mxu0
    %347 = vmatpush.bf16.msra.mxu0 %v275
    %348 = vmatpush.bf16.msra.mxu0 %v273
    %349 = vmatpush.bf16.msra.mxu0 %v271
    %350 = vmatpush.bf16.msra.mxu0 %v269
    %351 = vmatpush.bf16.msra.mxu0 %v267
    %352 = vmatpush.bf16.msra.mxu0 %v265
    %353 = vmatpush.bf16.msra.mxu0 %v263
    %354 = vmatpush.bf16.msra.mxu0 %v261
    %355 = vmatmul.bf16.gmra.mxu0 %v109
    %v356 = vpop.f32.mrf.mxu0
    %v357 = vadd.f32 %v344, %v356
    %v358 = vpop.f32.mrf.mxu0
    %359 = vdwg.mxu0
    %v360 = vmax.f32 %v331, 0.0
    %v361 = vmax.f32 %v357, 0.0
    %v362 = vpack.c.bf16 %v360, %v360
    %v363 = vpack.c.bf16 %v361, %v361
    %v364 = vld [vmem:[%s5] sm:$0xf]
    %v365 = vld [vmem:[%s5 + $0x4] sm:$0xf]
    %v366 = vld [vmem:[%s5 + $0x8] sm:$0xf]
    %v367 = vld [vmem:[%s5 + $0xc] sm:$0xf]
    %v368 = vld [vmem:[%s5 + $0x10] sm:$0xf]
    %v369 = vld [vmem:[%s5 + $0x14] sm:$0xf]
    %v370 = vld [vmem:[%s5 + $0x18] sm:$0xf]
    %v371 = vld [vmem:[%s5 + $0x1c] sm:$0xf]
    %v372 = vld [vmem:[%s5 + $0x20] sm:$0xf]
    %v373 = vld [vmem:[%s5 + $0x24] sm:$0xf]
    %v374 = vld [vmem:[%s5 + $0x28] sm:$0xf]
    %v375 = vld [vmem:[%s5 + $0x2c] sm:$0xf]
    %v376 = vld [vmem:[%s5 + $0x30] sm:$0xf]
    %v377 = vld [vmem:[%s5 + $0x34] sm:$0xf]
    %v378 = vld [vmem:[%s5 + $0x38] sm:$0xf]
    %v379 = vld [vmem:[%s5 + $0x3c] sm:$0xf]
    %v380 = vld [vmem:[%s5 + $0x40] sm:$0xf]
    %v381 = vld [vmem:[%s5 + $0x44] sm:$0xf]
    %v382 = vld [vmem:[%s5 + $0x48] sm:$0xf]
    %v383 = vld [vmem:[%s5 + $0x4c] sm:$0xf]
    %v384 = vld [vmem:[%s5 + $0x50] sm:$0xf]
    %v385 = vld [vmem:[%s5 + $0x54] sm:$0xf]
    %v386 = vld [vmem:[%s5 + $0x58] sm:$0xf]
    %v387 = vld [vmem:[%s5 + $0x5c] sm:$0xf]
    %v388 = vld [vmem:[%s5 + $0x60] sm:$0xf]
    %v389 = vld [vmem:[%s5 + $0x64] sm:$0xf]
    %v390 = vld [vmem:[%s5 + $0x68] sm:$0xf]
    %v391 = vld [vmem:[%s5 + $0x6c] sm:$0xf]
    %v392 = vld [vmem:[%s5 + $0x70] sm:$0xf]
    %v393 = vld [vmem:[%s5 + $0x74] sm:$0xf]
    %v394 = vld [vmem:[%s5 + $0x78] sm:$0xf]
    %v395 = vld [vmem:[%s5 + $0x7c] sm:$0xf]
    %v396 = vld [vmem:[%s6] sm:$0x1]
    %v398 = vperm.slane %v396, 0
    %v432 = vunpack.c.l.b16 %v364
    %v433 = vunpack.c.l.b16 %v365
    %v434 = vunpack.c.l.b16 %v366
    %v435 = vunpack.c.l.b16 %v367
    %v436 = vunpack.c.l.b16 %v368
    %v437 = vunpack.c.l.b16 %v369
    %v438 = vunpack.c.l.b16 %v370
    %v439 = vunpack.c.l.b16 %v371
    %v440 = vunpack.c.l.b16 %v372
    %v441 = vunpack.c.l.b16 %v373
    %v442 = vunpack.c.l.b16 %v374
    %v443 = vunpack.c.l.b16 %v375
    %v444 = vunpack.c.l.b16 %v376
    %v445 = vunpack.c.l.b16 %v377
    %v446 = vunpack.c.l.b16 %v378
    %v447 = vunpack.c.l.b16 %v379
    %v448 = vunpack.c.l.b16 %v380
    %v449 = vunpack.c.l.b16 %v381
    %v450 = vunpack.c.l.b16 %v382
    %v451 = vunpack.c.l.b16 %v383
    %v452 = vunpack.c.l.b16 %v384
    %v453 = vunpack.c.l.b16 %v385
    %v454 = vunpack.c.l.b16 %v386
    %v455 = vunpack.c.l.b16 %v387
    %v456 = vunpack.c.l.b16 %v388
    %v457 = vunpack.c.l.b16 %v389
    %v458 = vunpack.c.l.b16 %v390
    %v459 = vunpack.c.l.b16 %v391
    %v460 = vunpack.c.l.b16 %v392
    %v461 = vunpack.c.l.b16 %v393
    %v462 = vunpack.c.l.b16 %v394
    %v463 = vunpack.c.l.b16 %v395
    %v464 = vpack.c.b16 %v433, %v432
    %v465 = vpack.c.b16 %v435, %v434
    %v466 = vpack.c.b16 %v437, %v436
    %v467 = vpack.c.b16 %v439, %v438
    %v468 = vpack.c.b16 %v441, %v440
    %v469 = vpack.c.b16 %v443, %v442
    %v470 = vpack.c.b16 %v445, %v444
    %v471 = vpack.c.b16 %v447, %v446
    %v472 = vpack.c.b16 %v449, %v448
    %v473 = vpack.c.b16 %v451, %v450
    %v474 = vpack.c.b16 %v453, %v452
    %v475 = vpack.c.b16 %v455, %v454
    %v476 = vpack.c.b16 %v457, %v456
    %v477 = vpack.c.b16 %v459, %v458
    %v478 = vpack.c.b16 %v461, %v460
    %v479 = vpack.c.b16 %v463, %v462
    %496 = vmatpush.bf16.msra.mxu0 %v471
    %497 = vmatpush.bf16.msra.mxu0 %v470
    %498 = vmatpush.bf16.msra.mxu0 %v469
    %499 = vmatpush.bf16.msra.mxu0 %v468
    %500 = vmatpush.bf16.msra.mxu0 %v467
    %501 = vmatpush.bf16.msra.mxu0 %v466
    %502 = vmatpush.bf16.msra.mxu0 %v465
    %503 = vmatpush.bf16.msra.mxu0 %v464
    %504 = vmatmul.bf16.gmra.mxu0 %v362
    %v505 = vpop.f32.mrf.mxu0
    %v506 = vadd.f32 %v398, %v505
    %v507 = vpop.f32.mrf.mxu0
    %508 = vdwg.mxu0
    %509 = vmatpush.bf16.msra.mxu0 %v479
    %510 = vmatpush.bf16.msra.mxu0 %v478
    %511 = vmatpush.bf16.msra.mxu0 %v477
    %512 = vmatpush.bf16.msra.mxu0 %v476
    %513 = vmatpush.bf16.msra.mxu0 %v475
    %514 = vmatpush.bf16.msra.mxu0 %v474
    %515 = vmatpush.bf16.msra.mxu0 %v473
    %516 = vmatpush.bf16.msra.mxu0 %v472
    %517 = vmatmul.bf16.gmra.mxu0 %v363
    %v518 = vpop.f32.mrf.mxu0
    %v519 = vadd.f32 %v506, %v518
    %v520 = vpop.f32.mrf.mxu0
    %521 = vdwg.mxu0
    %v522 = vmul.f32 %v519, %v519
    %vm523 = vcmask 130048
    %v524 = vsel %vm523, %v522, 0.0
    %525 = vadd.xlane.f32.xlu0 %v524
    %v526 = vpop.xlane.xlu0 %525
    %v527 = vmax.f32 %v526, 1e-14
    %v528 = vrsqrt.pop %v527
    %v529 = vmul.f32 %v528, %v527
    %v530 = vmul.f32 %v529, %v528
    %v531 = vmul.f32 0.5, %v530
    %v532 = vsub.f32 1.5, %v531
    %v533 = vmul.f32 %v528, %v532
    %vm534 = vweird.f32 %v527
    %vm535 = vweird.f32 %v528
    %vm536 = vmor %vm534, %vm535
    %v537 = vsel %vm536, %v528, %v533
    %v538 = vmul.f32 %v519, %v537
    %539 = vst.msk [vmem:[#allocation5] sm:$0xff] %vm523, %v538
    // Predicated region
    $region34: #{mlp_head_forward.1} parent=1 // pred_check
      _
    $region35: #{mlp_head_forward.1} parent=1 // pred_check_branch
      %541 = sbr.rel (0) target = $region37
    $region36: #{mlp_head_forward.1} parent=1 // pred_region
      %543 = vsyncadd [#allocation4], 0
      %s545 = sshll.u32 [#allocation5], 4
      %s546 = int_to_ptr.vmem [resolvable:$true] %s545
      %s547 = sshll.u32 %s7, 4
      %s548 = int_to_ptr.hbm [resolvable:$true] %s547
      %550 = dma.vmem_to_hbm [thread:$0]  %s546, 128, %s548, [#allocation4]
    $region37: #{mlp_head_forward.1} parent=1 // pred_fallthru
      _
    // Predicated region
    $region38: #{mlp_head_forward.1} parent=1 // pred_check
      _
    $region39: #{mlp_head_forward.1} parent=1 // pred_check_branch
      %552 = sbr.rel (0) target = $region41
    $region40: #{mlp_head_forward.1} parent=1 // pred_region
      %554 = dma.done [#allocation4], 128
    $region41: #{mlp_head_forward.1} parent=1 // pred_fallthru
      _
    %555 = vsyncpa [#allocation3], 1
    %556 = vsyncpa [#allocation4], 1

</llo_original>
